<compile_context>
chip_gen: v7x
topology: tpu7x:2x2x1
jax: 0.10.0
libtpu: 0.0.40
codegen_flags: <defaults>
</compile_context>

<pallas_src>
import functools

import jax
import jax.numpy as jnp
from jax.experimental import pallas as pl
from jax.experimental.pallas import tpu as pltpu

LANE = 128


def _round_up(v, m):
    return ((v + m - 1) // m) * m


def mlp_kernel(x_ref, w1_ref, b1_ref, w2_ref, b2_ref, w3_ref, b3_ref,
               w4_ref, b4_ref, o_ref):
    # Layer 1: Linear(d_in -> 128) + ReLU   (bf16 operands, f32 accumulation)
    h = jnp.dot(x_ref[...].astype(jnp.bfloat16), w1_ref[...],
                preferred_element_type=jnp.float32)
    h = jnp.maximum(h + b1_ref[...], 0.0)
    # Layer 2: Linear(128 -> 64, padded to 128) + ReLU
    h = jnp.dot(h.astype(jnp.bfloat16), w2_ref[...],
                preferred_element_type=jnp.float32)
    h = jnp.maximum(h + b2_ref[...], 0.0)
    # Layer 3: Linear(64 -> 64, padded to 128) + ReLU
    h = jnp.dot(h.astype(jnp.bfloat16), w3_ref[...],
                preferred_element_type=jnp.float32)
    h = jnp.maximum(h + b3_ref[...], 0.0)
    # Layer 4: Linear(64 -> out_dim, padded to 128), no activation.
    # Padded output width keeps the store lane-dense (no masked vst).
    o_ref[...] = (jnp.dot(h.astype(jnp.bfloat16), w4_ref[...],
                          preferred_element_type=jnp.float32)
                  + b4_ref[...])


@functools.partial(jax.jit, static_argnames=("out_dim", "tile_b"))
def regression_model_forward(x, params, *, out_dim, tile_b=None):
    """x: (B, 2*n_points) float32. params: prepared (padded, bf16-weight) tuple."""
    (w1, b1), (w2, b2), (w3, b3), (w4, b4) = params
    B, d_in = x.shape
    out_pad = w4.shape[1]

    if tile_b is None:
        # Small batch: one grid step (no per-step pipeline overhead).
        # Large batch: 256-row tiles (multiple of 128) fill the MXU M dim and
        # amortize the ~0.35us/step cost; the parallel axis can split across
        # v7x's two TensorCores.
        tile_b = B if B <= 512 else 256
    grid = (pl.cdiv(B, tile_b),)

    def x_map(i):
        return (i, 0)

    def fixed_map(i):
        return (0, 0)

    flops = 2 * B * (d_in * w1.shape[1] + w2.shape[0] * w2.shape[1]
                     + w3.shape[0] * w3.shape[1] + w4.shape[0] * w4.shape[1])
    bytes_accessed = (x.size * x.dtype.itemsize
                      + sum(a.size * a.dtype.itemsize
                            for pair in params for a in pair)
                      + B * out_pad * 4)

    out = pl.pallas_call(
        mlp_kernel,
        out_shape=jax.ShapeDtypeStruct((B, out_pad), jnp.float32),
        grid_spec=pltpu.PrefetchScalarGridSpec(
            num_scalar_prefetch=0,
            grid=grid,
            in_specs=[
                pl.BlockSpec((tile_b, d_in), x_map),   # x tile (f32, cast in-kernel)
                pl.BlockSpec(w1.shape, fixed_map),      # W1 (d_in, 128) bf16
                pl.BlockSpec(b1.shape, fixed_map),      # b1 (1, 128) f32
                pl.BlockSpec(w2.shape, fixed_map),      # W2 (128, 128) bf16
                pl.BlockSpec(b2.shape, fixed_map),      # b2 (1, 128) f32
                pl.BlockSpec(w3.shape, fixed_map),      # W3 (128, 128) bf16
                pl.BlockSpec(b3.shape, fixed_map),      # b3 (1, 128) f32
                pl.BlockSpec(w4.shape, fixed_map),      # W4 (128, 128) bf16
                pl.BlockSpec(b4.shape, fixed_map),      # b4 (1, 128) f32
            ],
            out_specs=pl.BlockSpec((tile_b, out_pad), x_map),
        ),
        compiler_params=pltpu.CompilerParams(
            dimension_semantics=("parallel",)),
        cost_estimate=pl.CostEstimate(
            flops=flops, transcendentals=0, bytes_accessed=bytes_accessed),
    )(x, w1, b1, w2, b2, w3, b3, w4, b4)

    # Slice padded lanes back to the logical output width.
    return out[:, :out_dim]


def init_params(key, d_in, out_dim):
    """Deterministic init mimicking nn.Linear's uniform(-1/sqrt(fan_in), 1/sqrt(fan_in)).

    Returns logical (unpadded) params: W as (in, out), b as (out,)."""
    dims = [(d_in, 128), (128, 64), (64, 64), (64, out_dim)]
    params = []
    for fan_in, fan_out in dims:
        kw, kb, key = jax.random.split(key, 3)
        bound = 1.0 / jnp.sqrt(float(fan_in))
        w = jax.random.uniform(kw, (fan_in, fan_out), jnp.float32, -bound, bound)
        b = jax.random.uniform(kb, (fan_out,), jnp.float32, -bound, bound)
        params.append((w, b))
    return tuple(params)


def prepare_params(params):
    """Pad every layer width up to a multiple of 128 lanes (zero weights / zero
    biases -> numerically exact) and cast weights to bf16. Biases stay f32."""
    prepared = []
    prev_out_pad = None
    for i, (w, b) in enumerate(params):
        fan_in, fan_out = w.shape
        in_pad = fan_in if i == 0 else prev_out_pad
        out_pad = _round_up(fan_out, LANE)
        w_p = jnp.zeros((in_pad, out_pad), jnp.float32).at[:fan_in, :fan_out].set(w)
        b_p = jnp.zeros((1, out_pad), jnp.float32).at[0, :fan_out].set(b)
        prepared.append((w_p.astype(jnp.bfloat16), b_p))
        prev_out_pad = out_pad
    return tuple(prepared)


def reference_forward(x, params):
    """Pure-JAX reference mirroring the kernel's precision (bf16 operands,
    f32 accumulation) on the logical, unpadded params."""
    h = x
    n = len(params)
    for i, (w, b) in enumerate(params):
        h = jnp.dot(h.astype(jnp.bfloat16), w.astype(jnp.bfloat16),
                    preferred_element_type=jnp.float32) + b
        if i < n - 1:
            h = jnp.maximum(h, 0.0)
    return h


if __name__ == "__main__":
    # n_points = 8 -> input features = 2 * n_points = 16
    # families -> synthetic output dim = 8 (sum over families of n_args + 1)
    n_points = 8
    d_in = 2 * n_points
    out_dim = 8
    batch = 16

    key = jax.random.PRNGKey(0)
    kx, kp = jax.random.split(key)
    x = jax.random.normal(kx, (batch, d_in), dtype=jnp.float32)

    params = init_params(kp, d_in, out_dim)
    prepared = prepare_params(params)

    y = regression_model_forward(x, prepared, out_dim=out_dim)
    y = jax.block_until_ready(y)

    y_ref = reference_forward(x, params)
    assert y.shape == (batch, out_dim)
    assert jnp.allclose(y, y_ref, atol=1e-3, rtol=1e-3), "mismatch vs reference"

    print("KERNEL_OK")
</pallas_src>

<mosaic_0001>
module attributes {stable_mosaic.version = 11 : i64} {
  func.func @mlp_kernel(%arg0: i32, %arg1: memref<16x16xf32, #tpu.memory_space<vmem>>, %arg2: memref<16x128xbf16, #tpu.memory_space<vmem>>, %arg3: memref<1x128xf32, #tpu.memory_space<vmem>>, %arg4: memref<128x128xbf16, #tpu.memory_space<vmem>>, %arg5: memref<1x128xf32, #tpu.memory_space<vmem>>, %arg6: memref<128x128xbf16, #tpu.memory_space<vmem>>, %arg7: memref<1x128xf32, #tpu.memory_space<vmem>>, %arg8: memref<128x128xbf16, #tpu.memory_space<vmem>>, %arg9: memref<1x128xf32, #tpu.memory_space<vmem>>, %arg10: memref<16x128xf32, #tpu.memory_space<vmem>>) attributes {dimension_semantics = [#tpu.dimension_semantics<parallel>], iteration_bounds = array<i64: 1>, scalar_prefetch = 0 : i64, scratch_operands = 0 : i64, tpu.core_type = #tpu.core_type<tc>, window_params = [{transform_indices = @transform_0, window_bounds = array<i64: 16, 16>}, {pipeline_mode = #tpu.pipeline_mode<synchronous>, transform_indices = @transform_1, window_bounds = array<i64: 16, 128>}, {pipeline_mode = #tpu.pipeline_mode<synchronous>, transform_indices = @transform_2, window_bounds = array<i64: 1, 128>}, {pipeline_mode = #tpu.pipeline_mode<synchronous>, transform_indices = @transform_3, window_bounds = array<i64: 128, 128>}, {pipeline_mode = #tpu.pipeline_mode<synchronous>, transform_indices = @transform_4, window_bounds = array<i64: 1, 128>}, {pipeline_mode = #tpu.pipeline_mode<synchronous>, transform_indices = @transform_5, window_bounds = array<i64: 128, 128>}, {pipeline_mode = #tpu.pipeline_mode<synchronous>, transform_indices = @transform_6, window_bounds = array<i64: 1, 128>}, {pipeline_mode = #tpu.pipeline_mode<synchronous>, transform_indices = @transform_7, window_bounds = array<i64: 128, 128>}, {pipeline_mode = #tpu.pipeline_mode<synchronous>, transform_indices = @transform_8, window_bounds = array<i64: 1, 128>}, {transform_indices = @transform_9, window_bounds = array<i64: 16, 128>}]} {
    %c0 = arith.constant 0 : index
    %c0_0 = arith.constant 0 : index
    %0 = vector.load %arg1[%c0, %c0_0] : memref<16x16xf32, #tpu.memory_space<vmem>>, vector<16x16xf32>
    %1 = arith.truncf %0 : vector<16x16xf32> to vector<16x16xbf16>
    %c0_1 = arith.constant 0 : index
    %c0_2 = arith.constant 0 : index
    %2 = vector.load %arg2[%c0_1, %c0_2] : memref<16x128xbf16, #tpu.memory_space<vmem>>, vector<16x128xbf16>
    %cst = arith.constant dense<0.000000e+00> : vector<16x128xf32>
    %3 = tpu.matmul %1, %2, %cst {dimension_numbers = #tpu.dot_dimension_numbers<[1], [0], [0], [1], [0, 0, 1, 1], [], []>} : vector<16x16xbf16>, vector<16x128xbf16>, vector<16x128xf32> -> vector<16x128xf32>
    %c0_3 = arith.constant 0 : index
    %c0_4 = arith.constant 0 : index
    %4 = vector.load %arg3[%c0_3, %c0_4] : memref<1x128xf32, #tpu.memory_space<vmem>>, vector<1x128xf32>
    %5 = vector.broadcast %4 : vector<1x128xf32> to vector<16x128xf32>
    %6 = arith.addf %3, %5 : vector<16x128xf32>
    %cst_5 = arith.constant 0.000000e+00 : f32
    %7 = vector.broadcast %cst_5 : f32 to vector<16x128xf32>
    %8 = arith.maximumf %6, %7 : vector<16x128xf32>
    %9 = arith.truncf %8 : vector<16x128xf32> to vector<16x128xbf16>
    %c0_6 = arith.constant 0 : index
    %c0_7 = arith.constant 0 : index
    %10 = vector.load %arg4[%c0_6, %c0_7] : memref<128x128xbf16, #tpu.memory_space<vmem>>, vector<128x128xbf16>
    %cst_8 = arith.constant dense<0.000000e+00> : vector<16x128xf32>
    %11 = tpu.matmul %9, %10, %cst_8 {dimension_numbers = #tpu.dot_dimension_numbers<[1], [0], [0], [1], [0, 0, 1, 1], [], []>} : vector<16x128xbf16>, vector<128x128xbf16>, vector<16x128xf32> -> vector<16x128xf32>
    %c0_9 = arith.constant 0 : index
    %c0_10 = arith.constant 0 : index
    %12 = vector.load %arg5[%c0_9, %c0_10] : memref<1x128xf32, #tpu.memory_space<vmem>>, vector<1x128xf32>
    %13 = vector.broadcast %12 : vector<1x128xf32> to vector<16x128xf32>
    %14 = arith.addf %11, %13 : vector<16x128xf32>
    %cst_11 = arith.constant 0.000000e+00 : f32
    %15 = vector.broadcast %cst_11 : f32 to vector<16x128xf32>
    %16 = arith.maximumf %14, %15 : vector<16x128xf32>
    %17 = arith.truncf %16 : vector<16x128xf32> to vector<16x128xbf16>
    %c0_12 = arith.constant 0 : index
    %c0_13 = arith.constant 0 : index
    %18 = vector.load %arg6[%c0_12, %c0_13] : memref<128x128xbf16, #tpu.memory_space<vmem>>, vector<128x128xbf16>
    %cst_14 = arith.constant dense<0.000000e+00> : vector<16x128xf32>
    %19 = tpu.matmul %17, %18, %cst_14 {dimension_numbers = #tpu.dot_dimension_numbers<[1], [0], [0], [1], [0, 0, 1, 1], [], []>} : vector<16x128xbf16>, vector<128x128xbf16>, vector<16x128xf32> -> vector<16x128xf32>
    %c0_15 = arith.constant 0 : index
    %c0_16 = arith.constant 0 : index
    %20 = vector.load %arg7[%c0_15, %c0_16] : memref<1x128xf32, #tpu.memory_space<vmem>>, vector<1x128xf32>
    %21 = vector.broadcast %20 : vector<1x128xf32> to vector<16x128xf32>
    %22 = arith.addf %19, %21 : vector<16x128xf32>
    %cst_17 = arith.constant 0.000000e+00 : f32
    %23 = vector.broadcast %cst_17 : f32 to vector<16x128xf32>
    %24 = arith.maximumf %22, %23 : vector<16x128xf32>
    %25 = arith.truncf %24 : vector<16x128xf32> to vector<16x128xbf16>
    %c0_18 = arith.constant 0 : index
    %c0_19 = arith.constant 0 : index
    %26 = vector.load %arg8[%c0_18, %c0_19] : memref<128x128xbf16, #tpu.memory_space<vmem>>, vector<128x128xbf16>
    %cst_20 = arith.constant dense<0.000000e+00> : vector<16x128xf32>
    %27 = tpu.matmul %25, %26, %cst_20 {dimension_numbers = #tpu.dot_dimension_numbers<[1], [0], [0], [1], [0, 0, 1, 1], [], []>} : vector<16x128xbf16>, vector<128x128xbf16>, vector<16x128xf32> -> vector<16x128xf32>
    %c0_21 = arith.constant 0 : index
    %c0_22 = arith.constant 0 : index
    %28 = vector.load %arg9[%c0_21, %c0_22] : memref<1x128xf32, #tpu.memory_space<vmem>>, vector<1x128xf32>
    %29 = vector.broadcast %28 : vector<1x128xf32> to vector<16x128xf32>
    %30 = arith.addf %27, %29 : vector<16x128xf32>
    %c0_23 = arith.constant 0 : index
    %c0_24 = arith.constant 0 : index
    %31 = vector.load %arg10[%c0_23, %c0_24] : memref<16x128xf32, #tpu.memory_space<vmem>>, vector<16x128xf32>
    tpu.vector_store %arg10[%c0_23, %c0_24], %30 {strides = array<i32>} : memref<16x128xf32, #tpu.memory_space<vmem>>, vector<16x128xf32>,
    return
  }
  func.func @transform_0(%arg0: i32) -> (i32, i32) {
    %c0_i32 = arith.constant 0 : i32
    %c0_i32_0 = arith.constant 0 : i32
    return %arg0, %c0_i32 : i32, i32
  }
  func.func @transform_1(%arg0: i32) -> (i32, i32) {
    %c0_i32 = arith.constant 0 : i32
    %c0_i32_0 = arith.constant 0 : i32
    %c0_i32_1 = arith.constant 0 : i32
    return %c0_i32, %c0_i32_0 : i32, i32
  }
  func.func @transform_2(%arg0: i32) -> (i32, i32) {
    %c0_i32 = arith.constant 0 : i32
    %c0_i32_0 = arith.constant 0 : i32
    %c0_i32_1 = arith.constant 0 : i32
    return %c0_i32, %c0_i32_0 : i32, i32
  }
  func.func @transform_3(%arg0: i32) -> (i32, i32) {
    %c0_i32 = arith.constant 0 : i32
    %c0_i32_0 = arith.constant 0 : i32
    %c0_i32_1 = arith.constant 0 : i32
    return %c0_i32, %c0_i32_0 : i32, i32
  }
  func.func @transform_4(%arg0: i32) -> (i32, i32) {
    %c0_i32 = arith.constant 0 : i32
    %c0_i32_0 = arith.constant 0 : i32
    %c0_i32_1 = arith.constant 0 : i32
    return %c0_i32, %c0_i32_0 : i32, i32
  }
  func.func @transform_5(%arg0: i32) -> (i32, i32) {
    %c0_i32 = arith.constant 0 : i32
    %c0_i32_0 = arith.constant 0 : i32
    %c0_i32_1 = arith.constant 0 : i32
    return %c0_i32, %c0_i32_0 : i32, i32
  }
  func.func @transform_6(%arg0: i32) -> (i32, i32) {
    %c0_i32 = arith.constant 0 : i32
    %c0_i32_0 = arith.constant 0 : i32
    %c0_i32_1 = arith.constant 0 : i32
    return %c0_i32, %c0_i32_0 : i32, i32
  }
  func.func @transform_7(%arg0: i32) -> (i32, i32) {
    %c0_i32 = arith.constant 0 : i32
    %c0_i32_0 = arith.constant 0 : i32
    %c0_i32_1 = arith.constant 0 : i32
    return %c0_i32, %c0_i32_0 : i32, i32
  }
  func.func @transform_8(%arg0: i32) -> (i32, i32) {
    %c0_i32 = arith.constant 0 : i32
    %c0_i32_0 = arith.constant 0 : i32
    %c0_i32_1 = arith.constant 0 : i32
    return %c0_i32, %c0_i32_0 : i32, i32
  }
  func.func @transform_9(%arg0: i32) -> (i32, i32) {
    %c0_i32 = arith.constant 0 : i32
    %c0_i32_0 = arith.constant 0 : i32
    return %arg0, %c0_i32 : i32, i32
  }
}

</mosaic_0001>

<llo_original>
// kernel: regression_model_forward.1
$region0: #{regression_model_forward.1}
  #allocation0 [shape = 'u32[]', space=smem, size = 0x4, offset = 0x4, fixed_abs, tag = 'smem constant byte address 0x4 - core index']
  #allocation1 [shape = 'u32[144,128]{1,0:T(1,128)}', space=vmem, size = 0x12000, scoped, tag = 'internal scratch']
  %s0 = inlined_call_operand.hbm [shape: f32[16,16], index: 0, kind: input, shape index: {}]
  %s1 = inlined_call_operand.hbm [shape: bf16[16,128], index: 1, kind: input, shape index: {}]
  %s2 = inlined_call_operand.vmem [shape: f32[1,128], index: 2, kind: input, shape index: {}]
  %s3 = inlined_call_operand.hbm [shape: bf16[128,128], index: 3, kind: input, shape index: {}]
  %s4 = inlined_call_operand.vmem [shape: f32[1,128], index: 4, kind: input, shape index: {}]
  %s5 = inlined_call_operand.hbm [shape: bf16[128,128], index: 5, kind: input, shape index: {}]
  %s6 = inlined_call_operand.vmem [shape: f32[1,128], index: 6, kind: input, shape index: {}]
  %s7 = inlined_call_operand.hbm [shape: bf16[128,128], index: 7, kind: input, shape index: {}]
  %s8 = inlined_call_operand.vmem [shape: f32[1,128], index: 8, kind: input, shape index: {}]
  %s9 = inlined_call_operand.vmem [shape: f32[16,128], index: 9, kind: output, shape index: {}]
  %s10 = sld [smem:[#allocation0]]
  $region66: #{regression_model_forward.1} parent=0
    _
  %s12 = ssub.s32 1, %s10
  %s13 = scalar_select 0, %s12, %s10
  $region1: #{regression_model_forward.1} parent=0
    #allocation2 [shape = 'u8[8192]{0}', space=vmem, size = 0x2000, scoped, tag = 'input window, operand 0, single buffered']
    #allocation3 [shape = 's32[1]{0}', space=sflag, size = 0x4, scoped, tag = 'scoped memory for regression_model_forward.1']
    #allocation4 [shape = 'u8[4096]{0}', space=vmem, size = 0x1000, scoped, tag = 'input window, operand 1, single buffered']
    #allocation5 [shape = 's32[1]{0}', space=sflag, size = 0x4, scoped, tag = 'scoped memory for regression_model_forward.1']
    #allocation6 [shape = 'u8[32768]{0}', space=vmem, size = 0x8000, scoped, tag = 'input window, operand 3, single buffered']
    #allocation7 [shape = 'u8[32768]{0}', space=vmem, size = 0x8000, scoped, tag = 'input window, operand 5, single buffered']
    #allocation8 [shape = 's32[1]{0}', space=sflag, size = 0x4, scoped, tag = 'scoped memory for regression_model_forward.1']
    #allocation9 [shape = 'u8[32768]{0}', space=vmem, size = 0x8000, scoped, tag = 'input window, operand 7, single buffered']
    %14 = vsyncpa [#allocation3], 0
    %15 = vsyncpa [#allocation5], 0
    %16 = vsyncpa [#allocation8], 0
    // Predicated region
    $region2: #{regression_model_forward.1} parent=1 // pred_check
      _
    $region3: #{regression_model_forward.1} parent=1 // pred_check_branch
      %18 = sbr.rel (0) target = $region5
    $region4: #{regression_model_forward.1} parent=1 // pred_region
      %s20 = ssub.s32 256, 256
      %21 = vsyncadd [#allocation3], %s20
      %s22 = sshll.u32 [#allocation2], 4
      %s23 = int_to_ptr.vmem [resolvable:$true] %s22
      %28 = dma.hbm_to_vmem [thread:$0]  %s0, 256, %s23, [#allocation3], 128, 128, 8
    $region5: #{regression_model_forward.1} parent=1 // pred_fallthru
      _
    // Predicated region
    $region6: #{regression_model_forward.1} parent=1 // pred_check
      _
    $region7: #{regression_model_forward.1} parent=1 // pred_check_branch
      %30 = sbr.rel (0) target = $region9
    $region8: #{regression_model_forward.1} parent=1 // pred_region
      %s32 = ssub.s32 128, 128
      %33 = vsyncadd [#allocation5], %s32
      %s34 = sshll.u32 [#allocation4], 4
      %s35 = int_to_ptr.vmem [resolvable:$true] %s34
      %40 = dma.hbm_to_vmem [thread:$0]  %s1, 128, %s35, [#allocation5], 64, 64, 4
    $region9: #{regression_model_forward.1} parent=1 // pred_fallthru
      _
    // Predicated region
    $region10: #{regression_model_forward.1} parent=1 // pred_check
      _
    $region11: #{regression_model_forward.1} parent=1 // pred_check_branch
      %42 = sbr.rel (0) target = $region13
    $region12: #{regression_model_forward.1} parent=1 // pred_region
      _
    $region13: #{regression_model_forward.1} parent=1 // pred_fallthru
      _
    // Predicated region
    $region14: #{regression_model_forward.1} parent=1 // pred_check
      _
    $region15: #{regression_model_forward.1} parent=1 // pred_check_branch
      %44 = sbr.rel (0) target = $region17
    $region16: #{regression_model_forward.1} parent=1 // pred_region
      %s46 = ssub.s32 1024, 1024
      %47 = vsyncadd [#allocation5], %s46
      %s48 = sshll.u32 [#allocation6], 4
      %s49 = int_to_ptr.vmem [resolvable:$true] %s48
      %54 = dma.hbm_to_vmem [thread:$0]  %s3, 1024, %s49, [#allocation5], 64, 64, 4
    $region17: #{regression_model_forward.1} parent=1 // pred_fallthru
      _
    // Predicated region
    $region18: #{regression_model_forward.1} parent=1 // pred_check
      _
    $region19: #{regression_model_forward.1} parent=1 // pred_check_branch
      %56 = sbr.rel (0) target = $region21
    $region20: #{regression_model_forward.1} parent=1 // pred_region
      _
    $region21: #{regression_model_forward.1} parent=1 // pred_fallthru
      _
    // Predicated region
    $region22: #{regression_model_forward.1} parent=1 // pred_check
      _
    $region23: #{regression_model_forward.1} parent=1 // pred_check_branch
      %58 = sbr.rel (0) target = $region25
    $region24: #{regression_model_forward.1} parent=1 // pred_region
      %s60 = ssub.s32 1024, 1024
      %61 = vsyncadd [#allocation8], %s60
      %s62 = sshll.u32 [#allocation7], 4
      %s63 = int_to_ptr.vmem [resolvable:$true] %s62
      %68 = dma.hbm_to_vmem [thread:$0]  %s5, 1024, %s63, [#allocation8], 64, 64, 4
    $region25: #{regression_model_forward.1} parent=1 // pred_fallthru
      _
    // Predicated region
    $region26: #{regression_model_forward.1} parent=1 // pred_check
      _
    $region27: #{regression_model_forward.1} parent=1 // pred_check_branch
      %70 = sbr.rel (0) target = $region29
    $region28: #{regression_model_forward.1} parent=1 // pred_region
      _
    $region29: #{regression_model_forward.1} parent=1 // pred_fallthru
      _
    // Predicated region
    $region30: #{regression_model_forward.1} parent=1 // pred_check
      _
    $region31: #{regression_model_forward.1} parent=1 // pred_check_branch
      %72 = sbr.rel (0) target = $region33
    $region32: #{regression_model_forward.1} parent=1 // pred_region
      %s74 = ssub.s32 1024, 1024
      %75 = vsyncadd [#allocation8], %s74
      %s76 = sshll.u32 [#allocation9], 4
      %s77 = int_to_ptr.vmem [resolvable:$true] %s76
      %82 = dma.hbm_to_vmem [thread:$0]  %s7, 1024, %s77, [#allocation8], 64, 64, 4
    $region33: #{regression_model_forward.1} parent=1 // pred_fallthru
      _
    // Predicated region
    $region34: #{regression_model_forward.1} parent=1 // pred_check
      _
    $region35: #{regression_model_forward.1} parent=1 // pred_check_branch
      %84 = sbr.rel (0) target = $region37
    $region36: #{regression_model_forward.1} parent=1 // pred_region
      _
    $region37: #{regression_model_forward.1} parent=1 // pred_fallthru
      _
    // Predicated region
    $region38: #{regression_model_forward.1} parent=1 // pred_check
      _
    $region39: #{regression_model_forward.1} parent=1 // pred_check_branch
      %86 = sbr.rel (0) target = $region41
    $region40: #{regression_model_forward.1} parent=1 // pred_region
      %87 = dma.done [#allocation3], 256
    $region41: #{regression_model_forward.1} parent=1 // pred_fallthru
      _
    // Predicated region
    $region42: #{regression_model_forward.1} parent=1 // pred_check
      _
    $region43: #{regression_model_forward.1} parent=1 // pred_check_branch
      %89 = sbr.rel (0) target = $region45
    $region44: #{regression_model_forward.1} parent=1 // pred_region
      %90 = dma.done [#allocation5], 128
    $region45: #{regression_model_forward.1} parent=1 // pred_fallthru
      _
    // Predicated region
    $region46: #{regression_model_forward.1} parent=1 // pred_check
      _
    $region47: #{regression_model_forward.1} parent=1 // pred_check_branch
      %92 = sbr.rel (0) target = $region49
    $region48: #{regression_model_forward.1} parent=1 // pred_region
      %93 = dma.done [#allocation5], 1024
    $region49: #{regression_model_forward.1} parent=1 // pred_fallthru
      _
    // Predicated region
    $region50: #{regression_model_forward.1} parent=1 // pred_check
      _
    $region51: #{regression_model_forward.1} parent=1 // pred_check_branch
      %95 = sbr.rel (0) target = $region53
    $region52: #{regression_model_forward.1} parent=1 // pred_region
      %96 = dma.done [#allocation8], 1024
    $region53: #{regression_model_forward.1} parent=1 // pred_fallthru
      _
    // Predicated region
    $region54: #{regression_model_forward.1} parent=1 // pred_check
      _
    $region55: #{regression_model_forward.1} parent=1 // pred_check_branch
      %98 = sbr.rel (0) target = $region57
    $region56: #{regression_model_forward.1} parent=1 // pred_region
      %99 = dma.done [#allocation8], 1024
    $region57: #{regression_model_forward.1} parent=1 // pred_fallthru
      _
    %v101 = vld [vmem:[#allocation2] sm:$0xff]
    %v102 = vld [vmem:[#allocation2 + $0x8] sm:$0xff]
    %v103 = vpack.c.bf16 %v102, %v101
    %v104 = vld [vmem:[#allocation4] sm:$0xf]
    %v105 = vld [vmem:[#allocation4 + $0x4] sm:$0xf]
    %v106 = vld [vmem:[%s2] sm:$0x1]
    %v108 = vlaneseq
    %v109 = vshrl.u32 %v108, 7
    %v110 = vsub.s32 0, %v109
    %v111 = vrot.slane %v106, %v110
    %v115 = vunpack.c.l.b16 %v104
    %v116 = vunpack.c.l.b16 %v105
    %v117 = vpack.c.b16 %v116, %v115
    %vm119 = vcmask 130048
    %v121 = vsel %vm119, %v103, 0
    %123 = vmatprep.subr.bf16.mxu0 0
    %124 = vmatpush1.bf16.msra.mxu0 %v117
    %125 = vmatprep.subr.bf16.mxu0 0
    %126 = vmatpush1.bf16.msra.mxu0 0
    %127 = vmatprep.subr.bf16.mxu0 0
    %128 = vmatpush1.bf16.msra.mxu0 0
    %129 = vmatprep.subr.bf16.mxu0 0
    %130 = vmatpush1.bf16.msra.mxu0 0
    %131 = vmatprep.subr.bf16.mxu0 0
    %132 = vmatpush1.bf16.msra.mxu0 0
    %133 = vmatprep.subr.bf16.mxu0 0
    %134 = vmatpush1.bf16.msra.mxu0 0
    %135 = vmatprep.subr.bf16.mxu0 0
    %136 = vmatpush1.bf16.msra.mxu0 0
    %137 = vmatprep.subr.bf16.mxu0 0
    %138 = vmatpush1.bf16.msra.mxu0 0
    %139 = vmatprep.subr.bf16.mxu0 0
    %140 = vmatpush1.bf16.msra.mxu0 0
    %141 = vmatprep.subr.bf16.mxu0 0
    %142 = vmatpush1.bf16.msra.mxu0 0
    %143 = vmatprep.subr.bf16.mxu0 0
    %144 = vmatpush1.bf16.msra.mxu0 0
    %145 = vmatprep.subr.bf16.mxu0 0
    %146 = vmatpush1.bf16.msra.mxu0 0
    %147 = vmatprep.subr.bf16.mxu0 0
    %148 = vmatpush1.bf16.msra.mxu0 0
    %149 = vmatprep.subr.bf16.mxu0 0
    %150 = vmatpush1.bf16.msra.mxu0 0
    %151 = vmatprep.subr.bf16.mxu0 0
    %152 = vmatpush1.bf16.msra.mxu0 0
    %153 = vmatprep.subr.bf16.mxu0 0
    %154 = vmatpush1.bf16.msra.mxu0 0
    %155 = vmatprep.mubr.bf16.mxu0 0
    %156 = vmatmul.mubr.bf16.gmra.mrb[0].mxu0 %v121
    %v157 = vpop.f32.mrb[0].mxu0
    %v158 = vadd.f32 %v111, %v157
    %v159 = vpop.f32.mrb[0].mxu0
    %v160 = vpop.f32.mrb[0].mxu0
    %v161 = vadd.f32 %v111, %v160
    %v162 = vpop.f32.mrb[0].mxu0
    %163 = vdwg.mxu0
    %v164 = vmax.f32 %v158, 0.0
    %v165 = vmax.f32 %v161, 0.0
    %v166 = vpack.c.bf16 %v165, %v164
    %v167 = vld [vmem:[#allocation6] sm:$0xf]
    %v168 = vld [vmem:[#allocation6 + $0x4] sm:$0xf]
    %v169 = vld [vmem:[#allocation6 + $0x8] sm:$0xf]
    %v170 = vld [vmem:[#allocation6 + $0xc] sm:$0xf]
    %v171 = vld [vmem:[#allocation6 + $0x10] sm:$0xf]
    %v172 = vld [vmem:[#allocation6 + $0x14] sm:$0xf]
    %v173 = vld [vmem:[#allocation6 + $0x18] sm:$0xf]
    %v174 = vld [vmem:[#allocation6 + $0x1c] sm:$0xf]
    %v175 = vld [vmem:[#allocation6 + $0x20] sm:$0xf]
    %v176 = vld [vmem:[#allocation6 + $0x24] sm:$0xf]
    %v177 = vld [vmem:[#allocation6 + $0x28] sm:$0xf]
    %v178 = vld [vmem:[#allocation6 + $0x2c] sm:$0xf]
    %v179 = vld [vmem:[#allocation6 + $0x30] sm:$0xf]
    %v180 = vld [vmem:[#allocation6 + $0x34] sm:$0xf]
    %v181 = vld [vmem:[#allocation6 + $0x38] sm:$0xf]
    %v182 = vld [vmem:[#allocation6 + $0x3c] sm:$0xf]
    %v183 = vld [vmem:[%s4] sm:$0x1]
    %v185 = vlaneseq
    %v186 = vshrl.u32 %v185, 7
    %v187 = vsub.s32 0, %v186
    %v188 = vrot.slane %v183, %v187
    %v206 = vunpack.c.l.b16 %v167
    %v207 = vunpack.c.l.b16 %v168
    %v208 = vunpack.c.l.b16 %v169
    %v209 = vunpack.c.l.b16 %v170
    %v210 = vunpack.c.l.b16 %v171
    %v211 = vunpack.c.l.b16 %v172
    %v212 = vunpack.c.l.b16 %v173
    %v213 = vunpack.c.l.b16 %v174
    %v214 = vunpack.c.l.b16 %v175
    %v215 = vunpack.c.l.b16 %v176
    %v216 = vunpack.c.l.b16 %v177
    %v217 = vunpack.c.l.b16 %v178
    %v218 = vunpack.c.l.b16 %v179
    %v219 = vunpack.c.l.b16 %v180
    %v220 = vunpack.c.l.b16 %v181
    %v221 = vunpack.c.l.b16 %v182
    %v222 = vpack.c.b16 %v207, %v206
    %v223 = vpack.c.b16 %v209, %v208
    %v224 = vpack.c.b16 %v211, %v210
    %v225 = vpack.c.b16 %v213, %v212
    %v226 = vpack.c.b16 %v215, %v214
    %v227 = vpack.c.b16 %v217, %v216
    %v228 = vpack.c.b16 %v219, %v218
    %v229 = vpack.c.b16 %v221, %v220
    %238 = vmatprep.subr.bf16.mxu0 0
    %239 = vmatpush1.bf16.msra.mxu0 %v222
    %240 = vmatprep.subr.bf16.mxu0 0
    %241 = vmatpush1.bf16.msra.mxu0 %v223
    %242 = vmatprep.subr.bf16.mxu0 0
    %243 = vmatpush1.bf16.msra.mxu0 %v224
    %244 = vmatprep.subr.bf16.mxu0 0
    %245 = vmatpush1.bf16.msra.mxu0 %v225
    %246 = vmatprep.subr.bf16.mxu0 0
    %247 = vmatpush1.bf16.msra.mxu0 %v226
    %248 = vmatprep.subr.bf16.mxu0 0
    %249 = vmatpush1.bf16.msra.mxu0 %v227
    %250 = vmatprep.subr.bf16.mxu0 0
    %251 = vmatpush1.bf16.msra.mxu0 %v228
    %252 = vmatprep.subr.bf16.mxu0 0
    %253 = vmatpush1.bf16.msra.mxu0 %v229
    %254 = vmatprep.subr.bf16.mxu0 0
    %255 = vmatpush1.bf16.msra.mxu0 0
    %256 = vmatprep.subr.bf16.mxu0 0
    %257 = vmatpush1.bf16.msra.mxu0 0
    %258 = vmatprep.subr.bf16.mxu0 0
    %259 = vmatpush1.bf16.msra.mxu0 0
    %260 = vmatprep.subr.bf16.mxu0 0
    %261 = vmatpush1.bf16.msra.mxu0 0
    %262 = vmatprep.subr.bf16.mxu0 0
    %263 = vmatpush1.bf16.msra.mxu0 0
    %264 = vmatprep.subr.bf16.mxu0 0
    %265 = vmatpush1.bf16.msra.mxu0 0
    %266 = vmatprep.subr.bf16.mxu0 0
    %267 = vmatpush1.bf16.msra.mxu0 0
    %268 = vmatprep.subr.bf16.mxu0 0
    %269 = vmatpush1.bf16.msra.mxu0 0
    %270 = vmatprep.mubr.bf16.mxu0 0
    %271 = vmatmul.mubr.bf16.gmra.mrb[0].mxu0 %v166
    %v272 = vpop.f32.mrb[0].mxu0
    %v273 = vadd.f32 %v188, %v272
    %v274 = vpop.f32.mrb[0].mxu0
    %v275 = vpop.f32.mrb[0].mxu0
    %v276 = vadd.f32 %v188, %v275
    %v277 = vpop.f32.mrb[0].mxu0
    %278 = vdwg.mxu0
    %v279 = vmax.f32 %v273, 0.0
    %v280 = vmax.f32 %v276, 0.0
    %v281 = vpack.c.bf16 %v280, %v279
    %v282 = vld [vmem:[#allocation7] sm:$0xf]
    %v283 = vld [vmem:[#allocation7 + $0x4] sm:$0xf]
    %v284 = vld [vmem:[#allocation7 + $0x8] sm:$0xf]
    %v285 = vld [vmem:[#allocation7 + $0xc] sm:$0xf]
    %v286 = vld [vmem:[#allocation7 + $0x10] sm:$0xf]
    %v287 = vld [vmem:[#allocation7 + $0x14] sm:$0xf]
    %v288 = vld [vmem:[#allocation7 + $0x18] sm:$0xf]
    %v289 = vld [vmem:[#allocation7 + $0x1c] sm:$0xf]
    %v290 = vld [vmem:[#allocation7 + $0x20] sm:$0xf]
    %v291 = vld [vmem:[#allocation7 + $0x24] sm:$0xf]
    %v292 = vld [vmem:[#allocation7 + $0x28] sm:$0xf]
    %v293 = vld [vmem:[#allocation7 + $0x2c] sm:$0xf]
    %v294 = vld [vmem:[#allocation7 + $0x30] sm:$0xf]
    %v295 = vld [vmem:[#allocation7 + $0x34] sm:$0xf]
    %v296 = vld [vmem:[#allocation7 + $0x38] sm:$0xf]
    %v297 = vld [vmem:[#allocation7 + $0x3c] sm:$0xf]
    %v298 = vld [vmem:[%s6] sm:$0x1]
    %v300 = vlaneseq
    %v301 = vshrl.u32 %v300, 7
    %v302 = vsub.s32 0, %v301
    %v303 = vrot.slane %v298, %v302
    %v321 = vunpack.c.l.b16 %v282
    %v322 = vunpack.c.l.b16 %v283
    %v323 = vunpack.c.l.b16 %v284
    %v324 = vunpack.c.l.b16 %v285
    %v325 = vunpack.c.l.b16 %v286
    %v326 = vunpack.c.l.b16 %v287
    %v327 = vunpack.c.l.b16 %v288
    %v328 = vunpack.c.l.b16 %v289
    %v329 = vunpack.c.l.b16 %v290
    %v330 = vunpack.c.l.b16 %v291
    %v331 = vunpack.c.l.b16 %v292
    %v332 = vunpack.c.l.b16 %v293
    %v333 = vunpack.c.l.b16 %v294
    %v334 = vunpack.c.l.b16 %v295
    %v335 = vunpack.c.l.b16 %v296
    %v336 = vunpack.c.l.b16 %v297
    %v337 = vpack.c.b16 %v322, %v321
    %v338 = vpack.c.b16 %v324, %v323
    %v339 = vpack.c.b16 %v326, %v325
    %v340 = vpack.c.b16 %v328, %v327
    %v341 = vpack.c.b16 %v330, %v329
    %v342 = vpack.c.b16 %v332, %v331
    %v343 = vpack.c.b16 %v334, %v333
    %v344 = vpack.c.b16 %v336, %v335
    %353 = vmatprep.subr.bf16.mxu0 0
    %354 = vmatpush1.bf16.msra.mxu0 %v337
    %355 = vmatprep.subr.bf16.mxu0 0
    %356 = vmatpush1.bf16.msra.mxu0 %v338
    %357 = vmatprep.subr.bf16.mxu0 0
    %358 = vmatpush1.bf16.msra.mxu0 %v339
    %359 = vmatprep.subr.bf16.mxu0 0
    %360 = vmatpush1.bf16.msra.mxu0 %v340
    %361 = vmatprep.subr.bf16.mxu0 0
    %362 = vmatpush1.bf16.msra.mxu0 %v341
    %363 = vmatprep.subr.bf16.mxu0 0
    %364 = vmatpush1.bf16.msra.mxu0 %v342
    %365 = vmatprep.subr.bf16.mxu0 0
    %366 = vmatpush1.bf16.msra.mxu0 %v343
    %367 = vmatprep.subr.bf16.mxu0 0
    %368 = vmatpush1.bf16.msra.mxu0 %v344
    %369 = vmatprep.subr.bf16.mxu0 0
    %370 = vmatpush1.bf16.msra.mxu0 0
    %371 = vmatprep.subr.bf16.mxu0 0
    %372 = vmatpush1.bf16.msra.mxu0 0
    %373 = vmatprep.subr.bf16.mxu0 0
    %374 = vmatpush1.bf16.msra.mxu0 0
    %375 = vmatprep.subr.bf16.mxu0 0
    %376 = vmatpush1.bf16.msra.mxu0 0
    %377 = vmatprep.subr.bf16.mxu0 0
    %378 = vmatpush1.bf16.msra.mxu0 0
    %379 = vmatprep.subr.bf16.mxu0 0
    %380 = vmatpush1.bf16.msra.mxu0 0
    %381 = vmatprep.subr.bf16.mxu0 0
    %382 = vmatpush1.bf16.msra.mxu0 0
    %383 = vmatprep.subr.bf16.mxu0 0
    %384 = vmatpush1.bf16.msra.mxu0 0
    %385 = vmatprep.mubr.bf16.mxu0 0
    %386 = vmatmul.mubr.bf16.gmra.mrb[0].mxu0 %v281
    %v387 = vpop.f32.mrb[0].mxu0
    %v388 = vadd.f32 %v303, %v387
    %v389 = vpop.f32.mrb[0].mxu0
    %v390 = vpop.f32.mrb[0].mxu0
    %v391 = vadd.f32 %v303, %v390
    %v392 = vpop.f32.mrb[0].mxu0
    %393 = vdwg.mxu0
    %v394 = vmax.f32 %v388, 0.0
    %v395 = vmax.f32 %v391, 0.0
    %v396 = vpack.c.bf16 %v395, %v394
    %v397 = vld [vmem:[#allocation9] sm:$0xf]
    %v398 = vld [vmem:[#allocation9 + $0x4] sm:$0xf]
    %v399 = vld [vmem:[#allocation9 + $0x8] sm:$0xf]
    %v400 = vld [vmem:[#allocation9 + $0xc] sm:$0xf]
    %v401 = vld [vmem:[#allocation9 + $0x10] sm:$0xf]
    %v402 = vld [vmem:[#allocation9 + $0x14] sm:$0xf]
    %v403 = vld [vmem:[#allocation9 + $0x18] sm:$0xf]
    %v404 = vld [vmem:[#allocation9 + $0x1c] sm:$0xf]
    %v405 = vld [vmem:[#allocation9 + $0x20] sm:$0xf]
    %v406 = vld [vmem:[#allocation9 + $0x24] sm:$0xf]
    %v407 = vld [vmem:[#allocation9 + $0x28] sm:$0xf]
    %v408 = vld [vmem:[#allocation9 + $0x2c] sm:$0xf]
    %v409 = vld [vmem:[#allocation9 + $0x30] sm:$0xf]
    %v410 = vld [vmem:[#allocation9 + $0x34] sm:$0xf]
    %v411 = vld [vmem:[#allocation9 + $0x38] sm:$0xf]
    %v412 = vld [vmem:[#allocation9 + $0x3c] sm:$0xf]
    %v413 = vld [vmem:[%s8] sm:$0x1]
    %v415 = vlaneseq
    %v416 = vshrl.u32 %v415, 7
    %v417 = vsub.s32 0, %v416
    %v418 = vrot.slane %v413, %v417
    %v436 = vunpack.c.l.b16 %v397
    %v437 = vunpack.c.l.b16 %v398
    %v438 = vunpack.c.l.b16 %v399
    %v439 = vunpack.c.l.b16 %v400
    %v440 = vunpack.c.l.b16 %v401
    %v441 = vunpack.c.l.b16 %v402
    %v442 = vunpack.c.l.b16 %v403
    %v443 = vunpack.c.l.b16 %v404
    %v444 = vunpack.c.l.b16 %v405
    %v445 = vunpack.c.l.b16 %v406
    %v446 = vunpack.c.l.b16 %v407
    %v447 = vunpack.c.l.b16 %v408
    %v448 = vunpack.c.l.b16 %v409
    %v449 = vunpack.c.l.b16 %v410
    %v450 = vunpack.c.l.b16 %v411
    %v451 = vunpack.c.l.b16 %v412
    %v452 = vpack.c.b16 %v437, %v436
    %v453 = vpack.c.b16 %v439, %v438
    %v454 = vpack.c.b16 %v441, %v440
    %v455 = vpack.c.b16 %v443, %v442
    %v456 = vpack.c.b16 %v445, %v444
    %v457 = vpack.c.b16 %v447, %v446
    %v458 = vpack.c.b16 %v449, %v448
    %v459 = vpack.c.b16 %v451, %v450
    %468 = vmatprep.subr.bf16.mxu0 0
    %469 = vmatpush1.bf16.msra.mxu0 %v452
    %470 = vmatprep.subr.bf16.mxu0 0
    %471 = vmatpush1.bf16.msra.mxu0 %v453
    %472 = vmatprep.subr.bf16.mxu0 0
    %473 = vmatpush1.bf16.msra.mxu0 %v454
    %474 = vmatprep.subr.bf16.mxu0 0
    %475 = vmatpush1.bf16.msra.mxu0 %v455
    %476 = vmatprep.subr.bf16.mxu0 0
    %477 = vmatpush1.bf16.msra.mxu0 %v456
    %478 = vmatprep.subr.bf16.mxu0 0
    %479 = vmatpush1.bf16.msra.mxu0 %v457
    %480 = vmatprep.subr.bf16.mxu0 0
    %481 = vmatpush1.bf16.msra.mxu0 %v458
    %482 = vmatprep.subr.bf16.mxu0 0
    %483 = vmatpush1.bf16.msra.mxu0 %v459
    %484 = vmatprep.subr.bf16.mxu0 0
    %485 = vmatpush1.bf16.msra.mxu0 0
    %486 = vmatprep.subr.bf16.mxu0 0
    %487 = vmatpush1.bf16.msra.mxu0 0
    %488 = vmatprep.subr.bf16.mxu0 0
    %489 = vmatpush1.bf16.msra.mxu0 0
    %490 = vmatprep.subr.bf16.mxu0 0
    %491 = vmatpush1.bf16.msra.mxu0 0
    %492 = vmatprep.subr.bf16.mxu0 0
    %493 = vmatpush1.bf16.msra.mxu0 0
    %494 = vmatprep.subr.bf16.mxu0 0
    %495 = vmatpush1.bf16.msra.mxu0 0
    %496 = vmatprep.subr.bf16.mxu0 0
    %497 = vmatpush1.bf16.msra.mxu0 0
    %498 = vmatprep.subr.bf16.mxu0 0
    %499 = vmatpush1.bf16.msra.mxu0 0
    %500 = vmatprep.mubr.bf16.mxu0 0
    %501 = vmatmul.mubr.bf16.gmra.mrb[0].mxu0 %v396
    %v502 = vpop.f32.mrb[0].mxu0
    %v503 = vadd.f32 %v418, %v502
    %v504 = vpop.f32.mrb[0].mxu0
    %v505 = vpop.f32.mrb[0].mxu0
    %v506 = vadd.f32 %v418, %v505
    %v507 = vpop.f32.mrb[0].mxu0
    %508 = vdwg.mxu0
    %509 = vst [vmem:[%s9] sm:$0xff] %v503
    %510 = vst [vmem:[%s9 + $0x8] sm:$0xff] %v506
    // Predicated region
    $region58: #{regression_model_forward.1} parent=1 // pred_check
      _
    $region59: #{regression_model_forward.1} parent=1 // pred_check_branch
      %512 = sbr.rel (0) target = $region61
    $region60: #{regression_model_forward.1} parent=1 // pred_region
      _
    $region61: #{regression_model_forward.1} parent=1 // pred_fallthru
      _
    // Predicated region
    $region62: #{regression_model_forward.1} parent=1 // pred_check
      _
    $region63: #{regression_model_forward.1} parent=1 // pred_check_branch
      %514 = sbr.rel (0) target = $region65
    $region64: #{regression_model_forward.1} parent=1 // pred_region
      _
    $region65: #{regression_model_forward.1} parent=1 // pred_fallthru
      _
    %515 = vsyncpa [#allocation3], 1
    %516 = vsyncpa [#allocation5], 1
    %517 = vsyncpa [#allocation8], 1

</llo_original>
